<compile_context>
chip_gen: v7x
topology: tpu7x:2x2x1
jax: 0.10.0
libtpu: 0.0.40
codegen_flags: <defaults>
</compile_context>

<pallas_src>
import jax
import jax.numpy as jnp
from jax.experimental import pallas as pl
from jax.experimental.pallas import tpu as pltpu


_FUSED_FIT_BYTES = 40 * 1024 * 1024          # tile budget for the fused path
_FUSED_VMEM_LIMIT_BYTES = 48 * 1024 * 1024   # < 64 MiB physical VMEM on v7x
_SPLIT_VMEM_LIMIT_BYTES = 32 * 1024 * 1024
_SPLIT_HW_TILE_TARGET_BYTES = 2 * 1024 * 1024


def _conv_sigmoid_gate(y, w_ref, b_ref):
    """k=3 zero-padded conv along the channel (lane) axis + sigmoid.

    y: (1, C) float32 per-channel means, channels along lanes.
    Returns the (1, C) float32 gate.
    """
    C = y.shape[-1]
    w0, w1, w2 = w_ref[0], w_ref[1], w_ref[2]
    bias = b_ref[0]
    if C % 128 == 0:
        # Lane-aligned channel count: XLU lane roll (off the VPU/store path).
        # pltpu.roll requires non-negative shifts, so shift=-1 -> shift=C-1.
        idx = jax.lax.broadcasted_iota(jnp.int32, y.shape, 1)
        y_prev = jnp.where(idx == 0, 0.0, pltpu.roll(y, shift=1, axis=1))
        y_next = jnp.where(idx == C - 1, 0.0, pltpu.roll(y, shift=C - 1, axis=1))
        conv = w0 * y_prev + w1 * y + w2 * y_next + bias
    else:
        # Unaligned (typically small) C: 3-tap conv as a banded (C, C) matmul.
        row = jax.lax.broadcasted_iota(jnp.int32, (C, C), 0)
        col = jax.lax.broadcasted_iota(jnp.int32, (C, C), 1)
        band = (jnp.where(row == col - 1, w0, 0.0)
                + jnp.where(row == col, w1, 0.0)
                + jnp.where(row == col + 1, w2, 0.0))
        conv = jnp.dot(y, band, preferred_element_type=jnp.float32) + bias
    return jax.nn.sigmoid(conv)


def _eca_fused_kernel(w_ref, b_ref, x_ref, o_ref):
    # w_ref: SMEM f32[3]; b_ref: SMEM f32[1]
    # x_ref / o_ref: VMEM (1, C, HW) -- native NCHW view, HW lane-dense.
    hw = x_ref.shape[2]
    # Global average pool over the spatial (lane) axis; accumulate in f32.
    y = jnp.sum(x_ref[...].astype(jnp.float32), axis=2) * (1.0 / hw)   # (1, C)
    gate = _conv_sigmoid_gate(y, w_ref, b_ref)                          # (1, C)
    # Re-index x_ref for the multiply (instead of reusing the reduce's live
    # value) so Mosaic may reload from VMEM rather than spill vregs.  The gate
    # broadcasts along lanes from a per-sublane (per-channel) scalar.
    o_ref[...] = (x_ref[...] * gate[:, :, None].astype(o_ref.dtype))


def _eca_scale_kernel(g_ref, x_ref, o_ref):
    # g_ref: (1, C, 1) per-batch gate; x_ref / o_ref: (1, C, HW_TILE).
    o_ref[...] = (x_ref[...] * g_ref[...]).astype(o_ref.dtype)


def _gate_jax(y, w, b):
    """Conv1d(1,1,3,pad=1) + sigmoid on per-channel means. y: (B, C) f32."""
    C = y.shape[-1]
    y_pad = jnp.pad(y, ((0, 0), (1, 1)))
    conv = (w[0] * y_pad[:, 0:C] + w[1] * y_pad[:, 1:C + 1]
            + w[2] * y_pad[:, 2:C + 2] + b[0])
    return jax.nn.sigmoid(conv)


def _eca_fused(xf, w, b):
    """Single-pass kernel: one (1, C, HW) block per batch. 1 HBM read + 1 write."""
    B, C, HW = xf.shape
    itemsize = jnp.dtype(xf.dtype).itemsize
    cost = pl.CostEstimate(
        flops=3 * B * C * HW + 8 * B * C,
        transcendentals=B * C,
        bytes_accessed=2 * B * C * HW * itemsize + 16)
    return pl.pallas_call(
        _eca_fused_kernel,
        out_shape=jax.ShapeDtypeStruct((B, C, HW), xf.dtype),
        grid=(B,),
        in_specs=[
            pl.BlockSpec(memory_space=pltpu.MemorySpace.SMEM),   # conv weight (3,)
            pl.BlockSpec(memory_space=pltpu.MemorySpace.SMEM),   # conv bias (1,)
            pl.BlockSpec((1, C, HW), lambda bi: (bi, 0, 0)),     # x block
        ],
        out_specs=pl.BlockSpec((1, C, HW), lambda bi: (bi, 0, 0)),
        input_output_aliases={2: 0},   # output is a pure scaling of x
        compiler_params=pltpu.CompilerParams(
            dimension_semantics=("parallel",),
            vmem_limit_bytes=_FUSED_VMEM_LIMIT_BYTES),
        cost_estimate=cost,
    )(w, b, xf)


def _round_hw_tile(hw_tile, HW):
    """Enforce the lane rule: tile is a multiple of 128 or the full extent."""
    hw_tile = int(hw_tile)
    if hw_tile >= HW or HW <= 128:
        return HW
    return max(128, (hw_tile // 128) * 128)


def _eca_split(xf, w, b, hw_tile=None):
    """Large-HW fallback: JAX gate (O(B*C) math) + HW-tiled Pallas multiply."""
    B, C, HW = xf.shape
    itemsize = jnp.dtype(xf.dtype).itemsize

    # Gate (B, C, 1): tiny amount of work, computed in f32 in plain JAX.
    y = jnp.mean(xf.astype(jnp.float32), axis=2)
    gate = _gate_jax(y, w, b).astype(xf.dtype).reshape(B, C, 1)

    if hw_tile is None:
        hw_tile = _SPLIT_HW_TILE_TARGET_BYTES // max(1, C * itemsize)
    hw_tile = _round_hw_tile(hw_tile, HW)
    n_hw = pl.cdiv(HW, hw_tile)

    cost = pl.CostEstimate(
        flops=B * C * HW,
        transcendentals=0,
        bytes_accessed=(2 * B * C * HW + B * C) * itemsize)
    return pl.pallas_call(
        _eca_scale_kernel,
        out_shape=jax.ShapeDtypeStruct((B, C, HW), xf.dtype),
        grid=(B, n_hw),
        in_specs=[
            pl.BlockSpec((1, C, 1), lambda bi, ti: (bi, 0, 0)),          # gate
            pl.BlockSpec((1, C, hw_tile), lambda bi, ti: (bi, 0, ti)),   # x
        ],
        out_specs=pl.BlockSpec((1, C, hw_tile), lambda bi, ti: (bi, 0, ti)),
        input_output_aliases={1: 0},
        compiler_params=pltpu.CompilerParams(
            dimension_semantics=("parallel", "parallel"),
            vmem_limit_bytes=_SPLIT_VMEM_LIMIT_BYTES),
        cost_estimate=cost,
    )(gate, xf)


def eca_attention(x, w, b, *, max_fused_vmem_bytes=None, split_hw_tile=None):
    """ECA forward, PyTorch semantics: x is NCHW (B, C, H, W) or (B, C, L).

    Runs natively in the NCHW layout viewed as (B, C, H*W) -- no boundary
    transposes.  w is the Conv1d(1, 1, 3, padding=1) weight (any shape with 3
    elements), b its bias (1 element).
    """
    orig_shape = x.shape
    if x.ndim == 4:
        B, C, H, W_ = x.shape
        xf = x.reshape(B, C, H * W_)
    elif x.ndim == 3:
        xf = x
    else:
        raise ValueError(f"expected 3D or 4D input, got shape {x.shape}")
    B, C, HW = xf.shape
    w = jnp.asarray(w, jnp.float32).reshape(3)
    b = jnp.asarray(b, jnp.float32).reshape(1)

    itemsize = jnp.dtype(xf.dtype).itemsize
    budget = _FUSED_FIT_BYTES if max_fused_vmem_bytes is None else max_fused_vmem_bytes
    band_bytes = 0 if C % 128 == 0 else 4 * C * C
    # The pipeline double-buffers both the input and output tile: 4 tiles peak.
    fused_need = 4 * C * HW * itemsize + band_bytes

    if split_hw_tile is None and fused_need <= budget:
        out = _eca_fused(xf, w, b)
    else:
        out = _eca_split(xf, w, b, hw_tile=split_hw_tile)
    return out.reshape(orig_shape)


def eca_reference(x, w, b):
    """Pure-JAX reference mirroring the PyTorch forward (NCHW)."""
    B, C, H, W = x.shape
    y = jnp.mean(x, axis=(2, 3))                    # gap + squeeze -> (B, C)
    y_pad = jnp.pad(y, ((0, 0), (1, 1)))            # zero padding = 1
    conv = (w[0] * y_pad[:, 0:C]
            + w[1] * y_pad[:, 1:C + 1]
            + w[2] * y_pad[:, 2:C + 2]
            + b[0])                                 # Conv1d(1, 1, 3, pad=1)
    gate = jax.nn.sigmoid(conv)
    return x * gate[:, :, None, None]


if __name__ == "__main__":
    key = jax.random.PRNGKey(0)
    kx, kw, kb, kx2, kx3 = jax.random.split(key, 5)

    # Deterministic synthetic Conv1d(1, 1, kernel_size=3) parameters.
    w = jax.random.normal(kw, (3,), dtype=jnp.float32) * 0.5
    b = jax.random.normal(kb, (1,), dtype=jnp.float32) * 0.1

    # 1) Small NCHW tensor -> fused single-pass path (banded-matmul gate, C=4).
    B, C, H, W = 2, 4, 16, 16
    x = jax.random.normal(kx, (B, C, H, W), dtype=jnp.float32)
    ref = eca_reference(x, w, b)
    out = jax.block_until_ready(eca_attention(x, w, b))
    assert out.shape == (B, C, H, W)
    assert jnp.allclose(out, ref, atol=1e-5, rtol=1e-5), "fused (C=4) mismatch"

    # 2) Lane-aligned channel count -> roll-based gate branch of the fused path.
    B2, C2, H2, W2 = 2, 128, 8, 8
    x2 = jax.random.normal(kx2, (B2, C2, H2, W2), dtype=jnp.float32)
    ref2 = eca_reference(x2, w, b)
    out2 = jax.block_until_ready(eca_attention(x2, w, b))
    assert jnp.allclose(out2, ref2, atol=1e-5, rtol=1e-5), "fused (C=128) mismatch"

    # 3) Large-HW fallback path, forced with a 128-wide HW tile so the last
    #    block of the tiled multiply kernel (HW=324) is a padded partial block.
    B3, C3, H3, W3 = 2, 4, 18, 18
    x3 = jax.random.normal(kx3, (B3, C3, H3, W3), dtype=jnp.float32)
    ref3 = eca_reference(x3, w, b)
    out3 = jax.block_until_ready(eca_attention(x3, w, b, split_hw_tile=128))
    assert jnp.allclose(out3, ref3, atol=1e-5, rtol=1e-5), "split mismatch"

    print("KERNEL_OK")
</pallas_src>

<mosaic_0001>
module attributes {stable_mosaic.version = 11 : i64} {
  func.func @_eca_fused_kernel(%arg0: i32, %arg1: memref<3xf32, #tpu.memory_space<smem>>, %arg2: memref<1xf32, #tpu.memory_space<smem>>, %arg3: memref<1x4x256xf32, #tpu.memory_space<vmem>>, %arg4: memref<1x4x256xf32, #tpu.memory_space<vmem>>) attributes {dimension_semantics = [#tpu.dimension_semantics<parallel>], iteration_bounds = array<i64: 2>, scalar_prefetch = 0 : i64, scratch_operands = 0 : i64, tpu.core_type = #tpu.core_type<tc>, window_params = [{transform_indices = @transform_0, window_bounds = array<i64: 3>}, {transform_indices = @transform_1, window_bounds = array<i64: 1>}, {transform_indices = @transform_2, window_bounds = array<i64: 1, 4, 256>}, {transform_indices = @transform_3, window_bounds = array<i64: 1, 4, 256>}]} {
    %c0 = arith.constant 0 : index
    %c0_0 = arith.constant 0 : index
    %c0_1 = arith.constant 0 : index
    %0 = vector.load %arg3[%c0, %c0_0, %c0_1] : memref<1x4x256xf32, #tpu.memory_space<vmem>>, vector<1x4x256xf32>
    %cst = arith.constant dense<0.000000e+00> : vector<1x4xf32>
    %1 = vector.multi_reduction <add>, %0, %cst [2] : vector<1x4x256xf32> to vector<1x4xf32>
    %cst_2 = arith.constant 3.906250e-03 : f32
    %2 = vector.broadcast %cst_2 : f32 to vector<1x4xf32>
    %3 = arith.mulf %1, %2 : vector<1x4xf32>
    %c0_3 = arith.constant 0 : index
    %4 = memref.load %arg1[%c0_3] : memref<3xf32, #tpu.memory_space<smem>>
    %c1 = arith.constant 1 : index
    %5 = memref.load %arg1[%c1] : memref<3xf32, #tpu.memory_space<smem>>
    %c2 = arith.constant 2 : index
    %6 = memref.load %arg1[%c2] : memref<3xf32, #tpu.memory_space<smem>>
    %c0_4 = arith.constant 0 : index
    %7 = memref.load %arg2[%c0_4] : memref<1xf32, #tpu.memory_space<smem>>
    %8 = tpu.iota {dimensions = array<i32: 0>} : vector<4x4xi32>
    %9 = tpu.iota {dimensions = array<i32: 1>} : vector<4x4xi32>
    %c1_i32 = arith.constant 1 : i32
    %10 = vector.broadcast %c1_i32 : i32 to vector<4x4xi32>
    %11 = arith.subi %9, %10 : vector<4x4xi32>
    %12 = arith.cmpi eq, %8, %11 : vector<4x4xi32>
    %cst_5 = arith.constant 0.000000e+00 : f32
    %13 = vector.broadcast %4 : f32 to vector<4x4xf32>
    %14 = vector.broadcast %cst_5 : f32 to vector<4x4xf32>
    %15 = arith.select %12, %13, %14 : vector<4x4xi1>, vector<4x4xf32>
    %16 = arith.cmpi eq, %8, %9 : vector<4x4xi32>
    %cst_6 = arith.constant 0.000000e+00 : f32
    %17 = vector.broadcast %5 : f32 to vector<4x4xf32>
    %18 = vector.broadcast %cst_6 : f32 to vector<4x4xf32>
    %19 = arith.select %16, %17, %18 : vector<4x4xi1>, vector<4x4xf32>
    %20 = arith.addf %15, %19 : vector<4x4xf32>
    %c1_i32_7 = arith.constant 1 : i32
    %21 = vector.broadcast %c1_i32_7 : i32 to vector<4x4xi32>
    %22 = arith.addi %9, %21 : vector<4x4xi32>
    %23 = arith.cmpi eq, %8, %22 : vector<4x4xi32>
    %cst_8 = arith.constant 0.000000e+00 : f32
    %24 = vector.broadcast %6 : f32 to vector<4x4xf32>
    %25 = vector.broadcast %cst_8 : f32 to vector<4x4xf32>
    %26 = arith.select %23, %24, %25 : vector<4x4xi1>, vector<4x4xf32>
    %27 = arith.addf %20, %26 : vector<4x4xf32>
    %cst_9 = arith.constant dense<0.000000e+00> : vector<1x4xf32>
    %28 = tpu.matmul %3, %27, %cst_9 {dimension_numbers = #tpu.dot_dimension_numbers<[1], [0], [0], [1], [0, 0, 1, 1], [], []>} : vector<1x4xf32>, vector<4x4xf32>, vector<1x4xf32> -> vector<1x4xf32>
    %29 = vector.broadcast %7 : f32 to vector<1x4xf32>
    %30 = arith.addf %28, %29 : vector<1x4xf32>
    %31 = arith.negf %30 : vector<1x4xf32>
    %32 = math.exp %31 : vector<1x4xf32>
    %cst_10 = arith.constant 1.000000e+00 : f32
    %33 = vector.broadcast %cst_10 : f32 to vector<1x4xf32>
    %34 = arith.addf %33, %32 : vector<1x4xf32>
    %35 = arith.divf %33, %34 : vector<1x4xf32>
    %c0_11 = arith.constant 0 : index
    %c0_12 = arith.constant 0 : index
    %c0_13 = arith.constant 0 : index
    %36 = vector.load %arg3[%c0_11, %c0_12, %c0_13] : memref<1x4x256xf32, #tpu.memory_space<vmem>>, vector<1x4x256xf32>
    %37 = vector.shape_cast %35 : vector<1x4xf32> to vector<1x4x1xf32>
    %38 = vector.broadcast %37 : vector<1x4x1xf32> to vector<1x4x256xf32>
    %39 = arith.mulf %36, %38 : vector<1x4x256xf32>
    %c0_14 = arith.constant 0 : index
    %c0_15 = arith.constant 0 : index
    %c0_16 = arith.constant 0 : index
    %40 = vector.load %arg4[%c0_14, %c0_15, %c0_16] : memref<1x4x256xf32, #tpu.memory_space<vmem>>, vector<1x4x256xf32>
    tpu.vector_store %arg4[%c0_14, %c0_15, %c0_16], %39 {strides = array<i32>} : memref<1x4x256xf32, #tpu.memory_space<vmem>>, vector<1x4x256xf32>,
    return
  }
  func.func @transform_0(%arg0: i32) -> i32 {
    %c0_i32 = arith.constant 0 : i32
    %c0_i32_0 = arith.constant 0 : i32
    return %c0_i32 : i32
  }
  func.func @transform_1(%arg0: i32) -> i32 {
    %c0_i32 = arith.constant 0 : i32
    %c0_i32_0 = arith.constant 0 : i32
    return %c0_i32 : i32
  }
  func.func @transform_2(%arg0: i32) -> (i32, i32, i32) {
    %c0_i32 = arith.constant 0 : i32
    %c0_i32_0 = arith.constant 0 : i32
    %c0_i32_1 = arith.constant 0 : i32
    return %arg0, %c0_i32, %c0_i32_0 : i32, i32, i32
  }
  func.func @transform_3(%arg0: i32) -> (i32, i32, i32) {
    %c0_i32 = arith.constant 0 : i32
    %c0_i32_0 = arith.constant 0 : i32
    %c0_i32_1 = arith.constant 0 : i32
    return %arg0, %c0_i32, %c0_i32_0 : i32, i32, i32
  }
}

</mosaic_0001>

<llo_original>
// kernel: tpu_custom_call.1
$region0: #{tpu_custom_call.1}
  #allocation0 [shape = 'u32[]', space=smem, size = 0x4, offset = 0x4, fixed_abs, tag = 'smem constant byte address 0x4 - core index']
  #allocation1 [shape = 'u32[144,128]{1,0:T(1,128)}', space=vmem, size = 0x12000, scoped, tag = 'internal scratch']
  #allocation2 [shape = 'f32[1]{0:T(128)S(6)}', space=smem, size = 0x200, scoped, tag = 'scoped memory for tpu_custom_call.1']
  %s0 = inlined_call_operand.vmem [shape: f32[3], index: 0, kind: input, shape index: {}]
  %s1 = inlined_call_operand.<no memory space> [shape: f32[1], index: 1, kind: input, shape index: {}]
  %s2 = inlined_call_operand.hbm [shape: f32[2,4,256], index: 2, kind: input, shape index: {}, may-alias: {2,3}]
  %s3 = inlined_call_operand.hbm [shape: f32[2,4,256], index: 3, kind: output, shape index: {}, may-alias: {2,3}]
  %s4 = sld [smem:[#allocation0]]
  $region53: #{tpu_custom_call.1} parent=0
    _
  %s6 = ssub.s32 1, %s4
  %s7 = scalar_select 0, %s6, %s4
  %8 = sst [smem:[#allocation2]] %s1
  $region1: #{tpu_custom_call.1} parent=0
    #allocation3 [shape = 'u8[512]{0}', space=smem, size = 0x200, scoped, tag = 'input window, operand 0, single buffered']
    #allocation4 [shape = 's32[2]{0}', space=sflag, size = 0x8, scoped, tag = 'scoped memory for tpu_custom_call.1']
    #allocation5 [shape = 's32[2]{0}', space=sflag, size = 0x8, scoped, tag = 'scoped memory for tpu_custom_call.1']
    #allocation6 [shape = 's32[2]{0}', space=sflag, size = 0x8, scoped, tag = 'scoped memory for tpu_custom_call.1']
    #allocation7 [shape = 'u8[8192]{0}', space=vmem, size = 0x2000, scoped, tag = 'input window, operand 2']
    #allocation8 [shape = 'u8[8192]{0}', space=vmem, size = 0x2000, scoped, tag = 'output window, operand 0']
    %9 = vsyncpa [#allocation6], 0
    %10 = vsyncpa [#allocation4], 0
    %s11 = scalar_lea.sflag [#allocation4], 1
    %12 = vsyncpa %s11, 0
    %13 = vsyncpa [#allocation5], 0
    %s14 = scalar_lea.sflag [#allocation5], 1
    %15 = vsyncpa %s14, 0
    loop: start=0, step=1, limit=4
    $region2: #{tpu_custom_call.1} parent=1 // loop_pre_header
      _
    $region3: #{tpu_custom_call.1} parent=1 // loop_header
      %s17 = sphi 0, %s21
      %p18 = scmp.ge.s32.totalorder %s17, 4
      %s25 = sphi 0, %s25
      %s27 = sphi 0, %s25
      %s28 = sphi 0, %s27
      %s42 = sphi 0, %s28
      %s46 = sphi 0, %s46
      %s48 = sphi 0, %s46
      %s49 = sphi 0, %s48
      %s63 = sphi 0, %s49
      %s69 = sphi 0, %s71
      %s72 = sphi 0, %s69
      %s73 = sphi 0, %s72
      %s89 = sphi 0, %s73
      %s95 = sphi 0, %s97
      %s98 = sphi 0, %s95
      %s99 = sphi 0, %s98
      %s115 = sphi 0, %s99
    $region4: #{tpu_custom_call.1} parent=1 // loop_header_branch
      %20 = sbr.rel (%p18) target = $region8
    $region5: #{tpu_custom_call.1} parent=1 // loop_body
      %s22 = ssub.s32 %s17, 1
      %s23 = ssub.s32 %s17, 2
      %s24 = sadd.s32 %s17, 1
      %s26 = sadd.s32 %s25, 1
      %p29 = scmp.eq.s32.totalorder %s17, 1
      %p30 = scmp.ne.s32.totalorder %s25, %s27
      %p31 = scmp.eq.s32.totalorder %s17, 0
      %p32 = por %p30, %p31
      %p33 = scmp.ne.s32.totalorder %s25, %s27
      %p34 = scmp.eq.s32.totalorder %s22, 1
      %p35 = por %p33, %p34
      %p36 = scmp.ne.s32.totalorder %s27, %s28
      %p37 = scmp.eq.s32.totalorder %s22, 0
      %p38 = por %p36, %p37
      %p39 = scmp.ne.s32.totalorder %s27, %s28
      %p40 = scmp.eq.s32.totalorder %s23, 1
      %p41 = por %p39, %p40
      %p43 = scmp.ne.s32.totalorder %s28, %s42
      %p44 = scmp.eq.s32.totalorder %s23, 0
      %p45 = por %p43, %p44
      %s47 = sadd.s32 %s46, 1
      %p50 = scmp.eq.s32.totalorder %s17, 1
      %p51 = scmp.ne.s32.totalorder %s46, %s48
      %p52 = scmp.eq.s32.totalorder %s17, 0
      %p53 = por %p51, %p52
      %p54 = scmp.ne.s32.totalorder %s46, %s48
      %p55 = scmp.eq.s32.totalorder %s22, 1
      %p56 = por %p54, %p55
      %p57 = scmp.ne.s32.totalorder %s48, %s49
      %p58 = scmp.eq.s32.totalorder %s22, 0
      %p59 = por %p57, %p58
      %p60 = scmp.ne.s32.totalorder %s48, %s49
      %p61 = scmp.eq.s32.totalorder %s23, 1
      %p62 = por %p60, %p61
      %p64 = scmp.ne.s32.totalorder %s49, %s63
      %p65 = scmp.eq.s32.totalorder %s23, 0
      %p66 = por %p64, %p65
      %s67 = ssub.s32 %s17, %s24
      %p68 = scmp.eq.s32.totalorder %s67, 0
      %s70 = sadd.s32 %s69, 1
      %s71 = scalar_select %p68, %s69, %s70
      %p74 = pneg %p68
      %p75 = scmp.eq.s32.totalorder %s17, 1
      %p76 = por %p74, %p75
      %p77 = scmp.ne.s32.totalorder %s69, %s72
      %p78 = scmp.eq.s32.totalorder %s17, 0
      %p79 = por %p77, %p78
      %p80 = scmp.ne.s32.totalorder %s69, %s72
      %p81 = scmp.eq.s32.totalorder %s22, 1
      %p82 = por %p80, %p81
      %p83 = scmp.ne.s32.totalorder %s72, %s73
      %p84 = scmp.eq.s32.totalorder %s22, 0
      %p85 = por %p83, %p84
      %p86 = scmp.ne.s32.totalorder %s72, %s73
      %p87 = scmp.eq.s32.totalorder %s23, 1
      %p88 = por %p86, %p87
      %p90 = scmp.ne.s32.totalorder %s73, %s89
      %p91 = scmp.eq.s32.totalorder %s23, 0
      %p92 = por %p90, %p91
      %s93 = ssub.s32 %s17, %s24
      %p94 = scmp.eq.s32.totalorder %s93, 0
      %s96 = sadd.s32 %s95, 1
      %s97 = scalar_select %p94, %s95, %s96
      %p100 = pneg %p94
      %p101 = scmp.eq.s32.totalorder %s17, 1
      %p102 = por %p100, %p101
      %p103 = scmp.ne.s32.totalorder %s95, %s98
      %p104 = scmp.eq.s32.totalorder %s17, 0
      %p105 = por %p103, %p104
      %p106 = scmp.ne.s32.totalorder %s95, %s98
      %p107 = scmp.eq.s32.totalorder %s22, 1
      %p108 = por %p106, %p107
      %p109 = scmp.ne.s32.totalorder %s98, %s99
      %p110 = scmp.eq.s32.totalorder %s22, 0
      %p111 = por %p109, %p110
      %p112 = scmp.ne.s32.totalorder %s98, %s99
      %p113 = scmp.eq.s32.totalorder %s23, 1
      %p114 = por %p112, %p113
      %p116 = scmp.ne.s32.totalorder %s99, %s115
      %p117 = scmp.eq.s32.totalorder %s23, 0
      %p118 = por %p116, %p117
      %p119 = scmp.le.s32.totalorder 1, %s17
      %p120 = scmp.lt.s32.totalorder %s17, 3
      %p121 = pnand %p119, %p120
      %p122 = pneg %p121
      // Predicated region
      $region9: #{tpu_custom_call.1} parent=5 // pred_check
        _
      $region10: #{tpu_custom_call.1} parent=5 // pred_check_branch
        %124 = sbr.rel (%p121) target = $region12
      $region11: #{tpu_custom_call.1} parent=5 // pred_region
        %s125 = ssub.s32 %s17, 1
        // Predicated region
        $region13: #{tpu_custom_call.1} parent=11 // pred_check
          %p126 = pneg %p38
        $region14: #{tpu_custom_call.1} parent=11 // pred_check_branch
          %128 = sbr.rel (%p126) target = $region16
        $region15: #{tpu_custom_call.1} parent=11 // pred_region
          %s130 = ssub.s32 16, 16
          %131 = vsyncadd [#allocation6], %s130
          %s133 = sshll.u32 %s0, 4
          %s134 = int_to_ptr.vmem [resolvable:$true] %s133
          %136 = dma.vmem_to_smem %s134, 16, [#allocation3], [#allocation6]
        $region16: #{tpu_custom_call.1} parent=11 // pred_fallthru
          _
        // Predicated region
        $region17: #{tpu_custom_call.1} parent=11 // pred_check
          %p137 = pneg %p59
        $region18: #{tpu_custom_call.1} parent=11 // pred_check_branch
          %139 = sbr.rel (%p137) target = $region20
        $region19: #{tpu_custom_call.1} parent=11 // pred_region
          _
        $region20: #{tpu_custom_call.1} parent=11 // pred_fallthru
          _
      $region12: #{tpu_custom_call.1} parent=5 // pred_fallthru
        _
      %p140 = scmp.lt.s32.totalorder %s17, 2
      // Predicated region
      $region21: #{tpu_custom_call.1} parent=5 // pred_check
        %p141 = pneg %p140
      $region22: #{tpu_custom_call.1} parent=5 // pred_check_branch
        %143 = sbr.rel (%p141) target = $region24
      $region23: #{tpu_custom_call.1} parent=5 // pred_region
        // Predicated region
        $region25: #{tpu_custom_call.1} parent=23 // pred_check
          %p144 = pneg %p79
        $region26: #{tpu_custom_call.1} parent=23 // pred_check_branch
          %146 = sbr.rel (%p144) target = $region28
        $region27: #{tpu_custom_call.1} parent=23 // pred_region
          %s147 = sand.u32 %s69, 1
          %s148 = scalar_lea.sflag [#allocation4], %s147
          %s149 = sand.u32 %s69, 1
          %s150 = smul.addr %s149, 8
          %s151 = scalar_lea.vmem [#allocation7], %s150
          %s153 = ssub.s32 128, 128
          %154 = vsyncadd %s148, %s153
          %s155 = smul.addr %s17, 2
          %s156 = smul.addr %s155, 64
          %s157 = scalar_lea.hbm %s2, %s156
          %s159 = sshll.u32 %s151, 4
          %s160 = int_to_ptr.vmem [resolvable:$true] %s159
          %162 = dma.hbm_to_vmem [thread:$0]  %s157, 128, %s160, %s148
        $region28: #{tpu_custom_call.1} parent=23 // pred_fallthru
          _
      $region24: #{tpu_custom_call.1} parent=5 // pred_fallthru
        _
      %p163 = scmp.le.s32.totalorder 1, %s17
      %p164 = scmp.lt.s32.totalorder %s17, 3
      %p165 = pnand %p163, %p164
      %p166 = pneg %p165
      // Predicated region
      $region29: #{tpu_custom_call.1} parent=5 // pred_check
        _
      $region30: #{tpu_custom_call.1} parent=5 // pred_check_branch
        %168 = sbr.rel (%p165) target = $region32
      $region31: #{tpu_custom_call.1} parent=5 // pred_region
        %s169 = ssub.s32 %s17, 1
        // Predicated region
        $region33: #{tpu_custom_call.1} parent=31 // pred_check
          %p170 = pneg %p38
        $region34: #{tpu_custom_call.1} parent=31 // pred_check_branch
          %172 = sbr.rel (%p170) target = $region36
        $region35: #{tpu_custom_call.1} parent=31 // pred_region
          %173 = dma.done [#allocation6], 16
        $region36: #{tpu_custom_call.1} parent=31 // pred_fallthru
          _
        %s174 = sand.u32 %s72, 1
        %s175 = scalar_lea.sflag [#allocation4], %s174
        %s176 = sand.u32 %s72, 1
        %s177 = smul.addr %s176, 8
        %s178 = scalar_lea.vmem [#allocation7], %s177
        // Predicated region
        $region37: #{tpu_custom_call.1} parent=31 // pred_check
          %p179 = pneg %p85
        $region38: #{tpu_custom_call.1} parent=31 // pred_check_branch
          %181 = sbr.rel (%p179) target = $region40
        $region39: #{tpu_custom_call.1} parent=31 // pred_region
          %182 = dma.done %s175, 128
        $region40: #{tpu_custom_call.1} parent=31 // pred_fallthru
          _
        %183 = sfence
        %p184 = pneg %p38
        %p185 = pneg %p35
        %p186 = pneg %p59
        %p187 = pneg %p56
        %s188 = sand.u32 %s72, 1
        %s189 = scalar_lea.sflag [#allocation4], %s188
        %s190 = sand.u32 %s72, 1
        %s191 = smul.addr %s190, 8
        %s192 = scalar_lea.vmem [#allocation7], %s191
        %p193 = pneg %p85
        %p194 = pneg %p82
        %p195 = pneg %p111
        %p196 = pneg %p108
        %s197 = sand.u32 %s98, 1
        %s198 = scalar_lea.sflag [#allocation5], %s197
        %s199 = sand.u32 %s98, 1
        %s200 = smul.addr %s199, 8
        %s201 = scalar_lea.vmem [#allocation8], %s200
        %v202 = vld [vmem:[%s178] sm:$0xff]
        %v204 = vcombine.high %v202, %v202
        %vm206 = vcmask 1043456
        %v207 = vsel %vm206, %v202, 0.0
        %v208 = vsel %vm206, %v204, 0.0
        %v209 = vadd.f32 %v207, %v208
        %210 = vadd.xlane.f32.xlu0 %v209
        %v211 = vpop.xlane.xlu0 %210
        %v212 = vmul.f32 %v211, 0.00390625
        %s213 = sld [smem:[#allocation3]]
        %s214 = sld [smem:[#allocation3 + $0x1]]
        %s215 = sld [smem:[#allocation3 + $0x2]]
        %s216 = sld [smem:[#allocation2]]
        %v217 = vlaneseq
        %v218 = vshrl.u32 %v217, 7
        %v219 = vlaneseq
        %v220 = vand.u32 %v219, 127
        %v221 = vsub.s32 %v220, 1
        %vm222 = vcmp.eq.s32.totalorder %v218, %v221
        %v223 = vstv %s213
        %v224 = vsel %vm222, %v223, 0.0
        %vm225 = vcmp.eq.s32.totalorder %v218, %v220
        %v226 = vstv %s214
        %v227 = vsel %vm225, %v226, 0.0
        %v228 = vadd.f32 %v224, %v227
        %v229 = vadd.s32 %v220, 1
        %vm230 = vcmp.eq.s32.totalorder %v218, %v229
        %v231 = vstv %s215
        %v232 = vsel %vm230, %v231, 0.0
        %v233 = vadd.f32 %v228, %v232
        %v234 = vstv %s216
        %v236 = vlaneseq
        %v237 = vshrl.u32 %v236, 7
        %v238 = vsub.s32 %v220, %v237
        %v239 = vrot.slane %v212, %v238
        %vm240 = vcmask 31744
        %v241 = vsel %vm240, %v239, 0
        %v244 = vsel %vm206, %v233, 0
        %246 = vmatprep.subr.mxu0 0.0
        %247 = vmatpush1.msra.mxu0 %v244
        %248 = vmatprep.subr.mxu0 0.0
        %249 = vmatpush1.msra.mxu0 0.0
        %250 = vmatprep.subr.mxu0 0.0
        %251 = vmatpush1.msra.mxu0 0.0
        %252 = vmatprep.subr.mxu0 0.0
        %253 = vmatpush1.msra.mxu0 0.0
        %254 = vmatprep.subr.mxu0 0.0
        %255 = vmatpush1.msra.mxu0 0.0
        %256 = vmatprep.subr.mxu0 0.0
        %257 = vmatpush1.msra.mxu0 0.0
        %258 = vmatprep.subr.mxu0 0.0
        %259 = vmatpush1.msra.mxu0 0.0
        %260 = vmatprep.subr.mxu0 0.0
        %261 = vmatpush1.msra.mxu0 0.0
        %262 = vmatprep.subr.mxu0 0.0
        %263 = vmatpush1.msra.mxu0 0.0
        %264 = vmatprep.subr.mxu0 0.0
        %265 = vmatpush1.msra.mxu0 0.0
        %266 = vmatprep.subr.mxu0 0.0
        %267 = vmatpush1.msra.mxu0 0.0
        %268 = vmatprep.subr.mxu0 0.0
        %269 = vmatpush1.msra.mxu0 0.0
        %270 = vmatprep.subr.mxu0 0.0
        %271 = vmatpush1.msra.mxu0 0.0
        %272 = vmatprep.subr.mxu0 0.0
        %273 = vmatpush1.msra.mxu0 0.0
        %274 = vmatprep.subr.mxu0 0.0
        %275 = vmatpush1.msra.mxu0 0.0
        %276 = vmatprep.subr.mxu0 0.0
        %277 = vmatpush1.msra.mxu0 0.0
        %278 = vmatprep.subr.mxu0 0.0
        %279 = vmatpush1.msra.mxu0 0.0
        %280 = vmatprep.subr.mxu0 0.0
        %281 = vmatpush1.msra.mxu0 0.0
        %282 = vmatprep.subr.mxu0 0.0
        %283 = vmatpush1.msra.mxu0 0.0
        %284 = vmatprep.subr.mxu0 0.0
        %285 = vmatpush1.msra.mxu0 0.0
        %286 = vmatprep.subr.mxu0 0.0
        %287 = vmatpush1.msra.mxu0 0.0
        %288 = vmatprep.subr.mxu0 0.0
        %289 = vmatpush1.msra.mxu0 0.0
        %290 = vmatprep.subr.mxu0 0.0
        %291 = vmatpush1.msra.mxu0 0.0
        %292 = vmatprep.subr.mxu0 0.0
        %293 = vmatpush1.msra.mxu0 0.0
        %294 = vmatprep.subr.mxu0 0.0
        %295 = vmatpush1.msra.mxu0 0.0
        %296 = vmatprep.subr.mxu0 0.0
        %297 = vmatpush1.msra.mxu0 0.0
        %298 = vmatprep.subr.mxu0 0.0
        %299 = vmatpush1.msra.mxu0 0.0
        %300 = vmatprep.subr.mxu0 0.0
        %301 = vmatpush1.msra.mxu0 0.0
        %302 = vmatprep.subr.mxu0 0.0
        %303 = vmatpush1.msra.mxu0 0.0
        %304 = vmatprep.subr.mxu0 0.0
        %305 = vmatpush1.msra.mxu0 0.0
        %306 = vmatprep.subr.mxu0 0.0
        %307 = vmatpush1.msra.mxu0 0.0
        %308 = vmatprep.subr.mxu0 0.0
        %309 = vmatpush1.msra.mxu0 0.0
        %310 = vmatprep.mubr.f32.mxu0 0.0
        %311 = vmatmul.mubr.f32.gmra.mrb[0].mxu0 %v241
        %v312 = vpop.f32.mrb[0].mxu0
        %v313 = vadd.f32 %v234, %v312
        %v314 = vpop.f32.mrb[0].mxu0
        %315 = vdwg.mxu0
        %v316 = vxor.u32 %v313, 2147483648
        %v317 = vmul.f32 %v316, 1.442695
        %v318 = vpow.pop %v317
        %v319 = vadd.f32 %v318, 1.0
        %v320 = vrcp.pop %v319
        %v321 = vmul.f32 1.0, %v320
        %v322 = vlaneseq
        %v323 = vshrl.u32 %v322, 7
        %v324 = vsub.s32 0, %v323
        %v325 = vrot.slane %v321, %v324
        %327 = vbcast.lane.b32.xlu0 %v325, 256
        %v328 = vpop.permute.xlu0 %327
        %v331 = vunpack.c.l.s4 839922192
        %v332 = vunpack.c.0.s8 %v331
        %v333 = vlaneseq
        %v334 = vshrl.u32 %v333, 7
        %v335 = vsub.s32 %v332, %v334
        %v336 = vrot.slane %v328, %v335
        %v338 = vmul.f32 %v202, %v336
        %339 = vst [vmem:[%s201] sm:$0xff] %v338
        %s340 = sand.u32 %s98, 1
        %s341 = scalar_lea.sflag [#allocation5], %s340
        %s342 = sand.u32 %s98, 1
        %s343 = smul.addr %s342, 8
        %s344 = scalar_lea.vmem [#allocation8], %s343
        // Predicated region
        $region41: #{tpu_custom_call.1} parent=31 // pred_check
          %p345 = pneg %p108
        $region42: #{tpu_custom_call.1} parent=31 // pred_check_branch
          %347 = sbr.rel (%p345) target = $region44
        $region43: #{tpu_custom_call.1} parent=31 // pred_region
          %s349 = ssub.s32 128, 128
          %350 = vsyncadd %s341, %s349
          %s351 = smul.addr %s22, 2
          %s352 = smul.addr %s351, 64
          %s353 = scalar_lea.hbm %s3, %s352
          %s355 = sshll.u32 %s344, 4
          %s356 = int_to_ptr.vmem [resolvable:$true] %s355
          %358 = dma.vmem_to_hbm [thread:$0]  %s356, 128, %s353, %s341
        $region44: #{tpu_custom_call.1} parent=31 // pred_fallthru
          _
      $region32: #{tpu_custom_call.1} parent=5 // pred_fallthru
        _
      %p359 = scmp.le.s32.totalorder 2, %s17
      // Predicated region
      $region45: #{tpu_custom_call.1} parent=5 // pred_check
        %p360 = pneg %p359
      $region46: #{tpu_custom_call.1} parent=5 // pred_check_branch
        %362 = sbr.rel (%p360) target = $region48
      $region47: #{tpu_custom_call.1} parent=5 // pred_region
        %s363 = ssub.s32 %s17, 2
        // Predicated region
        $region49: #{tpu_custom_call.1} parent=47 // pred_check
          %p364 = pneg %p114
        $region50: #{tpu_custom_call.1} parent=47 // pred_check_branch
          %366 = sbr.rel (%p364) target = $region52
        $region51: #{tpu_custom_call.1} parent=47 // pred_region
          %s367 = sand.u32 %s99, 1
          %s368 = scalar_lea.sflag [#allocation5], %s367
          %s369 = sand.u32 %s99, 1
          %s370 = smul.addr %s369, 8
          %s371 = scalar_lea.vmem [#allocation8], %s370
          %372 = dma.done %s368, 128
        $region52: #{tpu_custom_call.1} parent=47 // pred_fallthru
          _
      $region48: #{tpu_custom_call.1} parent=5 // pred_fallthru
        _
    $region6: #{tpu_custom_call.1} parent=1 // loop_footer
      %s21 = sadd.s32 1, %s17
    $region7: #{tpu_custom_call.1} parent=1 // loop_footer_branch
      %16 = sbr.rel target = $region3
    $region8: #{tpu_custom_call.1} parent=1 // loop_exit
      _
    %373 = vsyncpa [#allocation4], 1
    %s374 = scalar_lea.sflag [#allocation4], 1
    %375 = vsyncpa %s374, 1
    %376 = vsyncpa [#allocation5], 1
    %s377 = scalar_lea.sflag [#allocation5], 1
    %378 = vsyncpa %s377, 1
    %379 = vsyncpa [#allocation6], 1
    %s380 = scalar_lea.sflag [#allocation6], 1
    %381 = vsyncpa %s380, 1

</llo_original>
